<compile_context>
chip_gen: v6e
topology: v6e:2x2x1
jax: 0.10.0
libtpu: 0.0.40
codegen_flags: <defaults>
</compile_context>

<pallas_src>
import jax
import jax.numpy as jnp
from jax.experimental import pallas as pl
from jax.experimental.pallas import tpu as pltpu


# --------------------------------------------------------------------------
# Kernels
# --------------------------------------------------------------------------
def _self_expression_kernel_f32(coef_ref, x_ref, y_ref):
    """f32 output: accumulate straight into the resident output block."""

    @pl.when(pl.program_id(2) == 0)
    def _zero():
        y_ref[...] = jnp.zeros_like(y_ref)

    y_ref[...] += jnp.dot(
        coef_ref[...], x_ref[...], preferred_element_type=jnp.float32
    )


def _self_expression_kernel_acc(coef_ref, x_ref, y_ref, acc_ref):
    """Non-f32 output: accumulate in f32 scratch, cast + store on last k."""

    @pl.when(pl.program_id(2) == 0)
    def _zero():
        acc_ref[...] = jnp.zeros_like(acc_ref)

    acc_ref[...] += jnp.dot(
        coef_ref[...], x_ref[...], preferred_element_type=jnp.float32
    )

    @pl.when(pl.program_id(2) == pl.num_programs(2) - 1)
    def _store():
        y_ref[...] = acc_ref[...].astype(y_ref.dtype)


# --------------------------------------------------------------------------
# Tiling helpers
# --------------------------------------------------------------------------
def _round_up(v: int, m: int) -> int:
    return ((v + m - 1) // m) * m


def _pick_tile(dim: int, candidates, cap=None) -> int:
    """Largest candidate (<= cap) dividing `dim`; `dim` is a multiple of 128."""
    for c in candidates:
        if cap is not None and c > cap:
            continue
        if dim % c == 0:
            return c
    return 128


def _smaller_divisor(dim: int, cur: int) -> int:
    """Largest multiple of 128 that divides `dim` and is < cur."""
    c = cur - 128
    while c > 128:
        if dim % c == 0:
            return c
        c -= 128
    return 128


def _vmem_bytes(tm, tk, tn, in_itemsize, out_itemsize, use_acc) -> int:
    # 2x double-buffered inputs, 2x double-buffered output, optional f32 acc.
    b = 2 * (tm * tk + tk * tn) * in_itemsize + 2 * tm * tn * out_itemsize
    if use_acc:
        b += tm * tn * 4
    return b


# --------------------------------------------------------------------------
# Wrapper
# --------------------------------------------------------------------------
def self_expression(coef: jax.Array, x: jax.Array, *,
                    compute_dtype=None, force_pallas: bool = False) -> jax.Array:
    """y = coef @ x (same semantics as the PyTorch SelfExpression forward).

    coef: (n, n), x: (n, d).  Returns (n, d).
    compute_dtype: optionally cast inputs (e.g. jnp.bfloat16) for the MXU;
    accumulation always happens in float32.
    """
    n, n2 = coef.shape
    assert n == n2, "Coefficient must be square (n, n)"
    n_x, d = x.shape
    assert n_x == n, "x must have shape (n, d)"

    out_dtype = jnp.promote_types(coef.dtype, x.dtype)

    # Tiny-problem fast path: kernel launch / per-step overhead dominates.
    if not force_pallas and (n * n + n * d) < 128 * 128:
        return jnp.dot(coef, x, preferred_element_type=jnp.float32).astype(out_dtype)

    if compute_dtype is not None:
        coef = coef.astype(compute_dtype)
        x = x.astype(compute_dtype)

    in_itemsize = jnp.dtype(coef.dtype).itemsize
    out_itemsize = jnp.dtype(out_dtype).itemsize
    use_acc = out_dtype != jnp.float32

    # Minimal lane/sublane-friendly padding (128 multiples, only when needed).
    # TODO(synk): for very large n, a masked ragged K-tail would avoid the
    # extra HBM copy that jnp.pad makes of the full coef matrix.
    n_pad = _round_up(n, 128)
    d_pad = _round_up(d, 128)
    coef_p = coef if n_pad == n else jnp.pad(coef, ((0, n_pad - n), (0, n_pad - n)))
    x_p = (x if (n_pad == n and d_pad == d)
           else jnp.pad(x, ((0, n_pad - n), (0, d_pad - d))))

    # ---- Tile selection -------------------------------------------------
    # tn = d_pad when modest -> grid_j == 1 and coef is streamed once.
    if d_pad <= 2048:
        tn = d_pad
    else:
        tn = _pick_tile(d_pad, tuple(range(2048, 0, -128)))
    grid_j = d_pad // tn

    # tm: big, but if grid_j == 1 keep >= 2 i-tiles so both v7x TCs get work.
    tm_cap = None
    if grid_j == 1 and n_pad >= 256:
        tm_cap = max(128, (n_pad // 2) // 128 * 128)
    tm = _pick_tile(n_pad, (512, 384, 256, 128), cap=tm_cap)

    # tk: big reduction chunk (fewer accumulation steps).
    tk = _pick_tile(n_pad, (512, 384, 256, 128))

    # ---- VMEM budget (v7x has only 64 MiB physical; stay well under) -----
    BUDGET = 36 * 1024 * 1024
    while _vmem_bytes(tm, tk, tn, in_itemsize, out_itemsize, use_acc) > BUDGET:
        if tk > 128:
            tk = _smaller_divisor(n_pad, tk)
        elif tn > 128:
            tn = _smaller_divisor(d_pad, tn)
        elif tm > 128:
            tm = _smaller_divisor(n_pad, tm)
        else:
            break

    grid_i = n_pad // tm
    grid_j = d_pad // tn
    grid_k = n_pad // tk
    grid = (grid_i, grid_j, grid_k)

    vmem_est = _vmem_bytes(tm, tk, tn, in_itemsize, out_itemsize, use_acc)
    vmem_limit = min(48 * 1024 * 1024,
                     max(32 * 1024 * 1024, vmem_est + 4 * 1024 * 1024))

    # ---- Cost estimate: account for per-tile re-reads --------------------
    cost = pl.CostEstimate(
        flops=2 * n_pad * n_pad * d_pad,
        transcendentals=0,
        bytes_accessed=(n_pad * n_pad * in_itemsize) * grid_j     # coef re-read per j
        + (n_pad * d_pad * in_itemsize) * grid_i                  # x re-read per i
        + n_pad * d_pad * out_itemsize,                           # output written once
    )

    kernel = _self_expression_kernel_acc if use_acc else _self_expression_kernel_f32
    scratch = [pltpu.VMEM((tm, tn), jnp.float32)] if use_acc else []

    y_p = pl.pallas_call(
        kernel,
        out_shape=jax.ShapeDtypeStruct((n_pad, d_pad), out_dtype),
        grid_spec=pltpu.PrefetchScalarGridSpec(
            num_scalar_prefetch=0,
            grid=grid,
            in_specs=[
                pl.BlockSpec((tm, tk), lambda i, j, k: (i, k)),  # coef row-tile
                pl.BlockSpec((tk, tn), lambda i, j, k: (k, j)),  # x col-tile
            ],
            out_specs=pl.BlockSpec((tm, tn), lambda i, j, k: (i, j)),
            scratch_shapes=scratch,
        ),
        compiler_params=pltpu.CompilerParams(
            dimension_semantics=("parallel", "parallel", "arbitrary"),
            vmem_limit_bytes=vmem_limit,
        ),
        cost_estimate=cost,
    )(coef_p, x_p)

    if n_pad == n and d_pad == d:
        return y_p
    return y_p[:n, :d]


# --------------------------------------------------------------------------
# Tests
# --------------------------------------------------------------------------
if __name__ == "__main__":
    # --- Tiny test matching the PyTorch module defaults --------------------
    n, dfeat = 8, 32
    coefficient = 0.0001 * jnp.ones((n, n), dtype=jnp.float32)   # module init
    key = jax.random.PRNGKey(0)
    x = jax.random.normal(key, (n, dfeat), dtype=jnp.float32)

    y = jax.block_until_ready(self_expression(coefficient, x, force_pallas=True))
    y_ref = coefficient @ x
    assert y.shape == (n, dfeat)
    assert jnp.allclose(y, y_ref, atol=1e-6, rtol=1e-6)

    # --- Multi-i-tile check (grid_i > 1, grid_j == 1, coef streamed once) --
    n2, d2 = 384, 256
    key_c, key_x = jax.random.split(jax.random.PRNGKey(0))
    coef2 = 0.01 * jax.random.normal(key_c, (n2, n2), dtype=jnp.float32)
    x2 = jax.random.normal(key_x, (n2, d2), dtype=jnp.float32)
    y2 = jax.block_until_ready(self_expression(coef2, x2))
    assert jnp.allclose(y2, coef2 @ x2, atol=1e-4, rtol=1e-4)

    # --- K-accumulation check (grid_k > 1) with direct-into-output path ----
    n3, d3 = 1024, 256
    key_c3, key_x3 = jax.random.split(jax.random.PRNGKey(1))
    coef3 = 0.01 * jax.random.normal(key_c3, (n3, n3), dtype=jnp.float32)
    x3 = jax.random.normal(key_x3, (n3, d3), dtype=jnp.float32)
    y3 = jax.block_until_ready(self_expression(coef3, x3))
    assert jnp.allclose(y3, coef3 @ x3, atol=1e-3, rtol=1e-3)

    # --- Optional bf16 compute path (f32 accumulation, looser tolerance) ---
    y3_bf16 = jax.block_until_ready(
        self_expression(coef3, x3, compute_dtype=jnp.bfloat16))
    assert jnp.allclose(y3_bf16, coef3 @ x3, atol=5e-2, rtol=5e-2)

    print("KERNEL_OK")
</pallas_src>

<mosaic_0001>
module attributes {stable_mosaic.version = 11 : i64} {
  func.func @_self_expression_kernel_f32(%arg0: i32, %arg1: i32, %arg2: i32, %arg3: memref<128x128xf32, #tpu.memory_space<vmem>>, %arg4: memref<128x128xf32, #tpu.memory_space<vmem>>, %arg5: memref<128x128xf32, #tpu.memory_space<vmem>>) attributes {dimension_semantics = [#tpu.dimension_semantics<parallel>, #tpu.dimension_semantics<parallel>, #tpu.dimension_semantics<arbitrary>], iteration_bounds = array<i64: 1, 1, 1>, scalar_prefetch = 0 : i64, scratch_operands = 0 : i64, tpu.core_type = #tpu.core_type<tc>, window_params = [{transform_indices = @transform_0, window_bounds = array<i64: 128, 128>}, {transform_indices = @transform_1, window_bounds = array<i64: 128, 128>}, {transform_indices = @transform_2, window_bounds = array<i64: 128, 128>}]} {
    %c0_i32 = arith.constant 0 : i32
    %0 = arith.cmpi eq, %arg2, %c0_i32 : i32
    %1 = arith.extui %0 : i1 to i32
    %c0_i32_0 = arith.constant 0 : i32
    %2 = arith.cmpi ne, %1, %c0_i32_0 : i32
    scf.if %2 {
      %cst_8 = arith.constant 0.000000e+00 : f32
      %9 = vector.broadcast %cst_8 : f32 to vector<128x128xf32>
      %c0_9 = arith.constant 0 : index
      %c0_10 = arith.constant 0 : index
      %10 = vector.load %arg5[%c0_9, %c0_10] : memref<128x128xf32, #tpu.memory_space<vmem>>, vector<128x128xf32>
      tpu.vector_store %arg5[%c0_9, %c0_10], %9 {strides = array<i32>} : memref<128x128xf32, #tpu.memory_space<vmem>>, vector<128x128xf32>,
    } else {
    }
    %c0 = arith.constant 0 : index
    %c0_1 = arith.constant 0 : index
    %3 = vector.load %arg5[%c0, %c0_1] : memref<128x128xf32, #tpu.memory_space<vmem>>, vector<128x128xf32>
    %c0_2 = arith.constant 0 : index
    %c0_3 = arith.constant 0 : index
    %4 = vector.load %arg3[%c0_2, %c0_3] : memref<128x128xf32, #tpu.memory_space<vmem>>, vector<128x128xf32>
    %c0_4 = arith.constant 0 : index
    %c0_5 = arith.constant 0 : index
    %5 = vector.load %arg4[%c0_4, %c0_5] : memref<128x128xf32, #tpu.memory_space<vmem>>, vector<128x128xf32>
    %cst = arith.constant dense<0.000000e+00> : vector<128x128xf32>
    %6 = tpu.matmul %4, %5, %cst {dimension_numbers = #tpu.dot_dimension_numbers<[1], [0], [0], [1], [0, 0, 1, 1], [], []>} : vector<128x128xf32>, vector<128x128xf32>, vector<128x128xf32> -> vector<128x128xf32>
    %7 = arith.addf %3, %6 : vector<128x128xf32>
    %c0_6 = arith.constant 0 : index
    %c0_7 = arith.constant 0 : index
    %8 = vector.load %arg5[%c0_6, %c0_7] : memref<128x128xf32, #tpu.memory_space<vmem>>, vector<128x128xf32>
    tpu.vector_store %arg5[%c0_6, %c0_7], %7 {strides = array<i32>} : memref<128x128xf32, #tpu.memory_space<vmem>>, vector<128x128xf32>,
    return
  }
  func.func @transform_0(%arg0: i32, %arg1: i32, %arg2: i32) -> (i32, i32) {
    %c0_i32 = arith.constant 0 : i32
    return %arg0, %arg2 : i32, i32
  }
  func.func @transform_1(%arg0: i32, %arg1: i32, %arg2: i32) -> (i32, i32) {
    %c0_i32 = arith.constant 0 : i32
    return %arg2, %arg1 : i32, i32
  }
  func.func @transform_2(%arg0: i32, %arg1: i32, %arg2: i32) -> (i32, i32) {
    %c0_i32 = arith.constant 0 : i32
    return %arg0, %arg1 : i32, i32
  }
}

</mosaic_0001>

<llo_original>
// kernel: tpu_custom_call.1
$region0: #{tpu_custom_call.1}
  #allocation0 [shape = 'u32[]', space=smem, size = 0x4, offset = 0x4, fixed_abs, tag = 'smem constant byte address 0x4 - core index']
  #allocation1 [shape = 'u32[144,128]{1,0:T(1,128)}', space=vmem, size = 0x12000, scoped, tag = 'internal scratch']
  %s0 = inlined_call_operand.hbm [shape: f32[128,128], index: 0, kind: input, shape index: {}]
  %s1 = inlined_call_operand.hbm [shape: f32[128,128], index: 1, kind: input, shape index: {}]
  %s2 = inlined_call_operand.hbm [shape: f32[128,128], index: 2, kind: output, shape index: {}]
  %s3 = sld [smem:[#allocation0]]
  $region30: #{tpu_custom_call.1} parent=0
    _
  %s5 = ssub.s32 1, %s3
  %s6 = scalar_select 0, %s5, %s3
  $region1: #{tpu_custom_call.1} parent=0
    #allocation2 [shape = 'u8[65536]{0}', space=vmem, size = 0x10000, scoped, tag = 'input window, operand 0, single buffered']
    #allocation3 [shape = 's32[1]{0}', space=sflag, size = 0x4, scoped, tag = 'scoped memory for tpu_custom_call.1']
    #allocation4 [shape = 's32[1]{0}', space=sflag, size = 0x4, scoped, tag = 'scoped memory for tpu_custom_call.1']
    #allocation5 [shape = 'u8[65536]{0}', space=vmem, size = 0x10000, scoped, tag = 'input window, operand 1, single buffered']
    #allocation6 [shape = 's32[1]{0}', space=sflag, size = 0x4, scoped, tag = 'scoped memory for tpu_custom_call.1']
    #allocation7 [shape = 'u8[65536]{0}', space=vmem, size = 0x10000, scoped, tag = 'output window, operand 0, single buffered']
    %7 = vsyncpa [#allocation3], 0
    %8 = vsyncpa [#allocation6], 0
    %9 = vsyncpa [#allocation4], 0
    // Predicated region
    $region2: #{tpu_custom_call.1} parent=1 // pred_check
      _
    $region3: #{tpu_custom_call.1} parent=1 // pred_check_branch
      %11 = sbr.rel (0) target = $region5
    $region4: #{tpu_custom_call.1} parent=1 // pred_region
      %s13 = ssub.s32 2048, 2048
      %14 = vsyncadd [#allocation3], %s13
      %s15 = sshll.u32 [#allocation2], 4
      %s16 = int_to_ptr.vmem [resolvable:$true] %s15
      %21 = dma.hbm_to_vmem [thread:$0]  %s0, 2048, %s16, [#allocation3], 128, 128, 8
    $region5: #{tpu_custom_call.1} parent=1 // pred_fallthru
      _
    // Predicated region
    $region6: #{tpu_custom_call.1} parent=1 // pred_check
      _
    $region7: #{tpu_custom_call.1} parent=1 // pred_check_branch
      %23 = sbr.rel (0) target = $region9
    $region8: #{tpu_custom_call.1} parent=1 // pred_region
      %s25 = ssub.s32 2048, 2048
      %26 = vsyncadd [#allocation6], %s25
      %s27 = sshll.u32 [#allocation5], 4
      %s28 = int_to_ptr.vmem [resolvable:$true] %s27
      %33 = dma.hbm_to_vmem [thread:$0]  %s1, 2048, %s28, [#allocation6], 128, 128, 8
    $region9: #{tpu_custom_call.1} parent=1 // pred_fallthru
      _
    // Predicated region
    $region10: #{tpu_custom_call.1} parent=1 // pred_check
      _
    $region11: #{tpu_custom_call.1} parent=1 // pred_check_branch
      %35 = sbr.rel (0) target = $region13
    $region12: #{tpu_custom_call.1} parent=1 // pred_region
      %36 = dma.done [#allocation3], 2048
    $region13: #{tpu_custom_call.1} parent=1 // pred_fallthru
      _
    // Predicated region
    $region14: #{tpu_custom_call.1} parent=1 // pred_check
      _
    $region15: #{tpu_custom_call.1} parent=1 // pred_check_branch
      %38 = sbr.rel (0) target = $region17
    $region16: #{tpu_custom_call.1} parent=1 // pred_region
      %39 = dma.done [#allocation6], 2048
    $region17: #{tpu_custom_call.1} parent=1 // pred_fallthru
      _
    %p40 = scmp.eq.s32.totalorder 0, 0
    // Predicated region
    $region18: #{tpu_custom_call.1} parent=1 // pred_check
      %p41 = pneg %p40
    $region19: #{tpu_custom_call.1} parent=1 // pred_check_branch
      %43 = sbr.rel (%p41) target = $region21
    $region20: #{tpu_custom_call.1} parent=1 // pred_region
      %44 = vst [vmem:[#allocation7] sm:$0xff] 0.0
      %45 = vst [vmem:[#allocation7 + $0x8] sm:$0xff] 0.0
      %46 = vst [vmem:[#allocation7 + $0x10] sm:$0xff] 0.0
      %47 = vst [vmem:[#allocation7 + $0x18] sm:$0xff] 0.0
      %48 = vst [vmem:[#allocation7 + $0x20] sm:$0xff] 0.0
      %49 = vst [vmem:[#allocation7 + $0x28] sm:$0xff] 0.0
      %50 = vst [vmem:[#allocation7 + $0x30] sm:$0xff] 0.0
      %51 = vst [vmem:[#allocation7 + $0x38] sm:$0xff] 0.0
      %52 = vst [vmem:[#allocation7 + $0x40] sm:$0xff] 0.0
      %53 = vst [vmem:[#allocation7 + $0x48] sm:$0xff] 0.0
      %54 = vst [vmem:[#allocation7 + $0x50] sm:$0xff] 0.0
      %55 = vst [vmem:[#allocation7 + $0x58] sm:$0xff] 0.0
      %56 = vst [vmem:[#allocation7 + $0x60] sm:$0xff] 0.0
      %57 = vst [vmem:[#allocation7 + $0x68] sm:$0xff] 0.0
      %58 = vst [vmem:[#allocation7 + $0x70] sm:$0xff] 0.0
      %59 = vst [vmem:[#allocation7 + $0x78] sm:$0xff] 0.0
    $region21: #{tpu_custom_call.1} parent=1 // pred_fallthru
      _
    %v60 = vld [vmem:[#allocation7] sm:$0xff]
    %v61 = vld [vmem:[#allocation7 + $0x8] sm:$0xff]
    %v62 = vld [vmem:[#allocation7 + $0x10] sm:$0xff]
    %v63 = vld [vmem:[#allocation7 + $0x18] sm:$0xff]
    %v64 = vld [vmem:[#allocation7 + $0x20] sm:$0xff]
    %v65 = vld [vmem:[#allocation7 + $0x28] sm:$0xff]
    %v66 = vld [vmem:[#allocation7 + $0x30] sm:$0xff]
    %v67 = vld [vmem:[#allocation7 + $0x38] sm:$0xff]
    %v68 = vld [vmem:[#allocation7 + $0x40] sm:$0xff]
    %v69 = vld [vmem:[#allocation7 + $0x48] sm:$0xff]
    %v70 = vld [vmem:[#allocation7 + $0x50] sm:$0xff]
    %v71 = vld [vmem:[#allocation7 + $0x58] sm:$0xff]
    %v72 = vld [vmem:[#allocation7 + $0x60] sm:$0xff]
    %v73 = vld [vmem:[#allocation7 + $0x68] sm:$0xff]
    %v74 = vld [vmem:[#allocation7 + $0x70] sm:$0xff]
    %v75 = vld [vmem:[#allocation7 + $0x78] sm:$0xff]
    %v76 = vld [vmem:[#allocation2] sm:$0xff]
    %v77 = vld [vmem:[#allocation2 + $0x8] sm:$0xff]
    %v78 = vld [vmem:[#allocation2 + $0x10] sm:$0xff]
    %v79 = vld [vmem:[#allocation2 + $0x18] sm:$0xff]
    %v80 = vld [vmem:[#allocation2 + $0x20] sm:$0xff]
    %v81 = vld [vmem:[#allocation2 + $0x28] sm:$0xff]
    %v82 = vld [vmem:[#allocation2 + $0x30] sm:$0xff]
    %v83 = vld [vmem:[#allocation2 + $0x38] sm:$0xff]
    %v84 = vld [vmem:[#allocation2 + $0x40] sm:$0xff]
    %v85 = vld [vmem:[#allocation2 + $0x48] sm:$0xff]
    %v86 = vld [vmem:[#allocation2 + $0x50] sm:$0xff]
    %v87 = vld [vmem:[#allocation2 + $0x58] sm:$0xff]
    %v88 = vld [vmem:[#allocation2 + $0x60] sm:$0xff]
    %v89 = vld [vmem:[#allocation2 + $0x68] sm:$0xff]
    %v90 = vld [vmem:[#allocation2 + $0x70] sm:$0xff]
    %v91 = vld [vmem:[#allocation2 + $0x78] sm:$0xff]
    %v92 = vld [vmem:[#allocation5] sm:$0xff]
    %v93 = vld [vmem:[#allocation5 + $0x8] sm:$0xff]
    %v94 = vld [vmem:[#allocation5 + $0x10] sm:$0xff]
    %v95 = vld [vmem:[#allocation5 + $0x18] sm:$0xff]
    %v96 = vld [vmem:[#allocation5 + $0x20] sm:$0xff]
    %v97 = vld [vmem:[#allocation5 + $0x28] sm:$0xff]
    %v98 = vld [vmem:[#allocation5 + $0x30] sm:$0xff]
    %v99 = vld [vmem:[#allocation5 + $0x38] sm:$0xff]
    %v100 = vld [vmem:[#allocation5 + $0x40] sm:$0xff]
    %v101 = vld [vmem:[#allocation5 + $0x48] sm:$0xff]
    %v102 = vld [vmem:[#allocation5 + $0x50] sm:$0xff]
    %v103 = vld [vmem:[#allocation5 + $0x58] sm:$0xff]
    %v104 = vld [vmem:[#allocation5 + $0x60] sm:$0xff]
    %v105 = vld [vmem:[#allocation5 + $0x68] sm:$0xff]
    %v106 = vld [vmem:[#allocation5 + $0x70] sm:$0xff]
    %v107 = vld [vmem:[#allocation5 + $0x78] sm:$0xff]
    %108 = vmatprep.subr.mxu0 0.0
    %109 = vmatpush1.msra.mxu0 %v107
    %110 = vmatprep.subr.mxu0 0.0
    %111 = vmatpush1.msra.mxu0 %v106
    %112 = vmatprep.subr.mxu0 0.0
    %113 = vmatpush1.msra.mxu0 %v105
    %114 = vmatprep.subr.mxu0 0.0
    %115 = vmatpush1.msra.mxu0 %v104
    %116 = vmatprep.subr.mxu0 0.0
    %117 = vmatpush1.msra.mxu0 %v103
    %118 = vmatprep.subr.mxu0 0.0
    %119 = vmatpush1.msra.mxu0 %v102
    %120 = vmatprep.subr.mxu0 0.0
    %121 = vmatpush1.msra.mxu0 %v101
    %122 = vmatprep.subr.mxu0 0.0
    %123 = vmatpush1.msra.mxu0 %v100
    %124 = vmatprep.subr.mxu0 0.0
    %125 = vmatpush1.msra.mxu0 %v99
    %126 = vmatprep.subr.mxu0 0.0
    %127 = vmatpush1.msra.mxu0 %v98
    %128 = vmatprep.subr.mxu0 0.0
    %129 = vmatpush1.msra.mxu0 %v97
    %130 = vmatprep.subr.mxu0 0.0
    %131 = vmatpush1.msra.mxu0 %v96
    %132 = vmatprep.subr.mxu0 0.0
    %133 = vmatpush1.msra.mxu0 %v95
    %134 = vmatprep.subr.mxu0 0.0
    %135 = vmatpush1.msra.mxu0 %v94
    %136 = vmatprep.subr.mxu0 0.0
    %137 = vmatpush1.msra.mxu0 %v93
    %138 = vmatprep.subr.mxu0 0.0
    %139 = vmatpush1.msra.mxu0 %v92
    %140 = vmatprep.subr.mxu0 0.0
    %141 = vmatpush2.msra.mxu0 0.0
    %142 = vmatprep.subr.mxu0 0.0
    %143 = vmatpush2.msra.mxu0 0.0
    %144 = vmatprep.subr.mxu0 0.0
    %145 = vmatpush2.msra.mxu0 0.0
    %146 = vmatprep.subr.mxu0 0.0
    %147 = vmatpush2.msra.mxu0 0.0
    %148 = vmatprep.subr.mxu0 0.0
    %149 = vmatpush2.msra.mxu0 0.0
    %150 = vmatprep.subr.mxu0 0.0
    %151 = vmatpush2.msra.mxu0 0.0
    %152 = vmatprep.subr.mxu0 0.0
    %153 = vmatpush2.msra.mxu0 0.0
    %154 = vmatprep.subr.mxu0 0.0
    %155 = vmatpush2.msra.mxu0 0.0
    %156 = vmatprep.subr.mxu0 0.0
    %157 = vmatpush2.msra.mxu0 0.0
    %158 = vmatprep.subr.mxu0 0.0
    %159 = vmatpush2.msra.mxu0 0.0
    %160 = vmatprep.subr.mxu0 0.0
    %161 = vmatpush2.msra.mxu0 0.0
    %162 = vmatprep.subr.mxu0 0.0
    %163 = vmatpush2.msra.mxu0 0.0
    %164 = vmatprep.subr.mxu0 0.0
    %165 = vmatpush2.msra.mxu0 0.0
    %166 = vmatprep.subr.mxu0 0.0
    %167 = vmatpush2.msra.mxu0 0.0
    %168 = vmatprep.subr.mxu0 0.0
    %169 = vmatpush2.msra.mxu0 0.0
    %170 = vmatprep.subr.mxu0 0.0
    %171 = vmatpush2.msra.mxu0 0.0
    %172 = vmatprep.mubr.f32.mxu0 0.0
    %173 = vmatmul.mubr.f32.gmra.mxu0 %v76
    %v174 = vpop.f32.mrf.mxu0
    %v175 = vadd.f32 0.0, %v174
    %v176 = vpop.f32.mrf.mxu0
    %177 = vmatprep.mubr.f32.mxu0 0.0
    %178 = vmatmul.mubr.f32.gmra.mxu0 %v77
    %v179 = vpop.f32.mrf.mxu0
    %v180 = vadd.f32 0.0, %v179
    %v181 = vpop.f32.mrf.mxu0
    %182 = vmatprep.mubr.f32.mxu0 0.0
    %183 = vmatmul.mubr.f32.gmra.mxu0 %v78
    %v184 = vpop.f32.mrf.mxu0
    %v185 = vadd.f32 0.0, %v184
    %v186 = vpop.f32.mrf.mxu0
    %187 = vmatprep.mubr.f32.mxu0 0.0
    %188 = vmatmul.mubr.f32.gmra.mxu0 %v79
    %v189 = vpop.f32.mrf.mxu0
    %v190 = vadd.f32 0.0, %v189
    %v191 = vpop.f32.mrf.mxu0
    %192 = vmatprep.mubr.f32.mxu0 0.0
    %193 = vmatmul.mubr.f32.gmra.mxu0 %v80
    %v194 = vpop.f32.mrf.mxu0
    %v195 = vadd.f32 0.0, %v194
    %v196 = vpop.f32.mrf.mxu0
    %197 = vmatprep.mubr.f32.mxu0 0.0
    %198 = vmatmul.mubr.f32.gmra.mxu0 %v81
    %v199 = vpop.f32.mrf.mxu0
    %v200 = vadd.f32 0.0, %v199
    %v201 = vpop.f32.mrf.mxu0
    %202 = vmatprep.mubr.f32.mxu0 0.0
    %203 = vmatmul.mubr.f32.gmra.mxu0 %v82
    %v204 = vpop.f32.mrf.mxu0
    %v205 = vadd.f32 0.0, %v204
    %v206 = vpop.f32.mrf.mxu0
    %207 = vmatprep.mubr.f32.mxu0 0.0
    %208 = vmatmul.mubr.f32.gmra.mxu0 %v83
    %v209 = vpop.f32.mrf.mxu0
    %v210 = vadd.f32 0.0, %v209
    %v211 = vpop.f32.mrf.mxu0
    %212 = vmatprep.mubr.f32.mxu0 0.0
    %213 = vmatmul.mubr.f32.gmra.mxu0 %v84
    %v214 = vpop.f32.mrf.mxu0
    %v215 = vadd.f32 0.0, %v214
    %v216 = vpop.f32.mrf.mxu0
    %217 = vmatprep.mubr.f32.mxu0 0.0
    %218 = vmatmul.mubr.f32.gmra.mxu0 %v85
    %v219 = vpop.f32.mrf.mxu0
    %v220 = vadd.f32 0.0, %v219
    %v221 = vpop.f32.mrf.mxu0
    %222 = vmatprep.mubr.f32.mxu0 0.0
    %223 = vmatmul.mubr.f32.gmra.mxu0 %v86
    %v224 = vpop.f32.mrf.mxu0
    %v225 = vadd.f32 0.0, %v224
    %v226 = vpop.f32.mrf.mxu0
    %227 = vmatprep.mubr.f32.mxu0 0.0
    %228 = vmatmul.mubr.f32.gmra.mxu0 %v87
    %v229 = vpop.f32.mrf.mxu0
    %v230 = vadd.f32 0.0, %v229
    %v231 = vpop.f32.mrf.mxu0
    %232 = vmatprep.mubr.f32.mxu0 0.0
    %233 = vmatmul.mubr.f32.gmra.mxu0 %v88
    %v234 = vpop.f32.mrf.mxu0
    %v235 = vadd.f32 0.0, %v234
    %v236 = vpop.f32.mrf.mxu0
    %237 = vmatprep.mubr.f32.mxu0 0.0
    %238 = vmatmul.mubr.f32.gmra.mxu0 %v89
    %v239 = vpop.f32.mrf.mxu0
    %v240 = vadd.f32 0.0, %v239
    %v241 = vpop.f32.mrf.mxu0
    %242 = vmatprep.mubr.f32.mxu0 0.0
    %243 = vmatmul.mubr.f32.gmra.mxu0 %v90
    %v244 = vpop.f32.mrf.mxu0
    %v245 = vadd.f32 0.0, %v244
    %v246 = vpop.f32.mrf.mxu0
    %247 = vmatprep.mubr.f32.mxu0 0.0
    %248 = vmatmul.mubr.f32.gmra.mxu0 %v91
    %v249 = vpop.f32.mrf.mxu0
    %v250 = vadd.f32 0.0, %v249
    %v251 = vpop.f32.mrf.mxu0
    %252 = vdwg.mxu0
    %v253 = vadd.f32 %v60, %v175
    %v254 = vadd.f32 %v61, %v180
    %v255 = vadd.f32 %v62, %v185
    %v256 = vadd.f32 %v63, %v190
    %v257 = vadd.f32 %v64, %v195
    %v258 = vadd.f32 %v65, %v200
    %v259 = vadd.f32 %v66, %v205
    %v260 = vadd.f32 %v67, %v210
    %v261 = vadd.f32 %v68, %v215
    %v262 = vadd.f32 %v69, %v220
    %v263 = vadd.f32 %v70, %v225
    %v264 = vadd.f32 %v71, %v230
    %v265 = vadd.f32 %v72, %v235
    %v266 = vadd.f32 %v73, %v240
    %v267 = vadd.f32 %v74, %v245
    %v268 = vadd.f32 %v75, %v250
    %269 = vst [vmem:[#allocation7] sm:$0xff] %v253
    %270 = vst [vmem:[#allocation7 + $0x8] sm:$0xff] %v254
    %271 = vst [vmem:[#allocation7 + $0x10] sm:$0xff] %v255
    %272 = vst [vmem:[#allocation7 + $0x18] sm:$0xff] %v256
    %273 = vst [vmem:[#allocation7 + $0x20] sm:$0xff] %v257
    %274 = vst [vmem:[#allocation7 + $0x28] sm:$0xff] %v258
    %275 = vst [vmem:[#allocation7 + $0x30] sm:$0xff] %v259
    %276 = vst [vmem:[#allocation7 + $0x38] sm:$0xff] %v260
    %277 = vst [vmem:[#allocation7 + $0x40] sm:$0xff] %v261
    %278 = vst [vmem:[#allocation7 + $0x48] sm:$0xff] %v262
    %279 = vst [vmem:[#allocation7 + $0x50] sm:$0xff] %v263
    %280 = vst [vmem:[#allocation7 + $0x58] sm:$0xff] %v264
    %281 = vst [vmem:[#allocation7 + $0x60] sm:$0xff] %v265
    %282 = vst [vmem:[#allocation7 + $0x68] sm:$0xff] %v266
    %283 = vst [vmem:[#allocation7 + $0x70] sm:$0xff] %v267
    %284 = vst [vmem:[#allocation7 + $0x78] sm:$0xff] %v268
    // Predicated region
    $region22: #{tpu_custom_call.1} parent=1 // pred_check
      _
    $region23: #{tpu_custom_call.1} parent=1 // pred_check_branch
      %286 = sbr.rel (0) target = $region25
    $region24: #{tpu_custom_call.1} parent=1 // pred_region
      %s288 = ssub.s32 2048, 2048
      %289 = vsyncadd [#allocation4], %s288
      %s290 = sshll.u32 [#allocation7], 4
      %s291 = int_to_ptr.vmem [resolvable:$true] %s290
      %296 = dma.vmem_to_hbm [thread:$0]  %s291, 2048, %s2, [#allocation4], 128, 128, 8
    $region25: #{tpu_custom_call.1} parent=1 // pred_fallthru
      _
    // Predicated region
    $region26: #{tpu_custom_call.1} parent=1 // pred_check
      _
    $region27: #{tpu_custom_call.1} parent=1 // pred_check_branch
      %298 = sbr.rel (0) target = $region29
    $region28: #{tpu_custom_call.1} parent=1 // pred_region
      %299 = dma.done [#allocation4], 2048
    $region29: #{tpu_custom_call.1} parent=1 // pred_fallthru
      _
    %300 = vsyncpa [#allocation3], 1
    %301 = vsyncpa [#allocation6], 1
    %302 = vsyncpa [#allocation4], 1

</llo_original>
